<compile_context>
chip_gen: v7x
topology: tpu7x:2x2x1
jax: 0.10.0
libtpu: 0.0.40
codegen_flags: <defaults>
</compile_context>

<pallas_src>
import jax
import jax.numpy as jnp
from jax import lax
from jax.experimental import pallas as pl
from jax.experimental.pallas import tpu as pltpu


def _round_up(n, m):
    return ((n + m - 1) // m) * m


def _cdiv(a, b):
    return -(-a // b)


def _vmem_capacity_bytes():
    try:
        info = pltpu.get_tpu_info()
        cap = getattr(info, "vmem_capacity_bytes", None)
        if cap:
            return int(cap)
    except Exception:
        pass
    return 128 * 2**20


def prepare_tf_ae_weights(w_enc, w_dec, *, lane_align=128, g_align=512,
                          compute_dtype=jnp.bfloat16):
    """One-time (model-load) weight preparation.

    w_enc: [K, G] encoder Linear weight (PyTorch [out, in]), already masked by
           the prior network connectivity.
    w_dec: [G, K] decoder Linear weight (PyTorch [out, in]).

    Returns (we_t, wd_t): zero-padded, transposed-to-[in, out], compute-dtype
    weights.  The gene axis is padded to a multiple of g_align (>=512) so the
    forward pass can always pick lane-dense encoder chunks / decoder tiles
    that divide it.  Use lane_align=256 on v6e/v7x for full 256x256 MXU
    occupancy of the TF (K) axis.
    """
    K, G = w_enc.shape
    assert w_dec.shape == (G, K)
    g_align = max(g_align, lane_align, 128)
    Gp = _round_up(G, g_align)
    Kp = _round_up(K, lane_align)
    we_t = jnp.zeros((Gp, Kp), compute_dtype).at[:G, :K].set(
        w_enc.T.astype(compute_dtype))
    wd_t = jnp.zeros((Kp, Gp), compute_dtype).at[:K, :G].set(
        w_dec.T.astype(compute_dtype))
    return we_t, wd_t


def _pick_tiles(B, Gp, Kp, x_itemsize, out_itemsize, budget,
                tm_max, tgk_max, tg_max):
    """Largest (tm, tgk, tg) that fits the VMEM budget (priority tm > tg > tgk)."""
    tgk_cands = [c for c in (2048, 1024, 512, 256, 128)
                 if c <= min(tgk_max, Gp) and Gp % c == 0]
    tg_cands = [c for c in (2048, 1024, 512, 256, 128)
                if c <= min(tg_max, Gp) and Gp % c == 0]
    if not tgk_cands:
        tgk_cands = [Gp]
    if not tg_cands:
        tg_cands = [Gp]

    tm = min(tm_max, _round_up(B, 16))
    tm = max(16, _round_up(tm, 16))

    def vmem_est(tm_, tgk_, tg_):
        return (2 * tm_ * tgk_ * x_itemsize        # x chunk (double-buffered)
                + 2 * tgk_ * Kp * 2                # encoder weight chunk (bf16)
                + 2 * Kp * tg_ * 2                 # decoder weight tile (bf16)
                + 2 * tm_ * tg_ * out_itemsize     # output tile
                + tm_ * Kp * (4 + 2))              # f32 acc + bf16 h scratch

    while True:
        for tg in tg_cands:
            for tgk in tgk_cands:
                if vmem_est(tm, tgk, tg) <= budget:
                    return tm, tgk, tg
        if tm <= 16:
            return 16, tgk_cands[-1], tg_cands[-1]
        tm = max(16, _round_up(tm // 2, 16))


def tf_autoencoder_forward(x, we_t, wd_t, *, out_dtype=None,
                           tm_max=512, tgk_max=2048, tg_max=1024):
    """Fused TFAutoencoder forward (eval mode).

    x:    [B, G]   expression matrix (f32 or bf16; cast to bf16 in-kernel)
    we_t: [Gp, Kp] prepared (transposed/padded/bf16) encoder weight
    wd_t: [Kp, Gp] prepared (transposed/padded/bf16) decoder weight
    returns x_hat: [B, G] in out_dtype (default x.dtype)
    """
    B, G = x.shape
    Gp, Kp = we_t.shape
    assert wd_t.shape == (Kp, Gp)
    assert Gp >= G and Gp % 128 == 0 and Kp % 128 == 0
    compute_dtype = we_t.dtype
    out_dtype = x.dtype if out_dtype is None else out_dtype

    xsz = jnp.dtype(x.dtype).itemsize
    osz = jnp.dtype(out_dtype).itemsize

    # VMEM budget: 75% of physical capacity (≈48 MiB on v7x, ≈96 MiB on v5e/v6e)
    # leaves headroom for compiler scratch / semaphores / pipeline metadata.
    vmem_cap = _vmem_capacity_bytes() * 3 // 4
    tm, tgk, tg = _pick_tiles(B, Gp, Kp, xsz, osz, vmem_cap,
                              tm_max=tm_max, tgk_max=tgk_max, tg_max=tg_max)

    nb = _cdiv(B, tm)
    nk = _cdiv(G, tgk)            # encoder chunks over the real gene axis
    ng = _cdiv(G, tg)             # decoder output tiles over the real gene axis
    assert nk * tgk <= Gp and ng * tg <= Gp
    rem = G - (nk - 1) * tgk      # valid columns in the last encoder chunk
    rem = 0 if rem == tgk else rem

    def kernel(x_ref, we_ref, wd_ref, out_ref, acc_ref, h_ref):
        j = pl.program_id(1)

        # --- encoder: streamed contraction over G chunks -------------------
        @pl.when(j == 0)
        def _():
            acc_ref[...] = jnp.zeros_like(acc_ref)

        @pl.when(j < nk)
        def _():
            xb = x_ref[...]
            if rem:
                # Mask garbage columns of the ragged last chunk (x is read
                # unpadded; out-of-bounds VMEM content is undefined).
                col = lax.broadcasted_iota(jnp.int32, xb.shape, 1)
                valid_cols = jnp.where(j == nk - 1, rem, tgk)
                xb = jnp.where(col < valid_cols, xb, jnp.zeros_like(xb))
            acc_ref[...] += jnp.dot(xb.astype(compute_dtype), we_ref[...],
                                    preferred_element_type=jnp.float32)

        @pl.when(j == nk - 1)
        def _():
            # latent = ReLU(x @ W_enc^T), kept resident (bf16) for all decoder tiles
            h_ref[...] = jnp.maximum(acc_ref[...], 0.0).astype(h_ref.dtype)

        # --- decoder: one lane-dense output tile per step ------------------
        @pl.when(j >= nk)
        def _():
            y = jnp.dot(h_ref[...], wd_ref[...],
                        preferred_element_type=jnp.float32)
            out_ref[...] = jnp.maximum(y, 0.0).astype(out_ref.dtype)

    # Index maps: during decoder steps x/We stay on their last chunk (no
    # re-DMA); during encoder steps Wd/out stay on tile 0 (early prefetch).
    x_spec = pl.BlockSpec((tm, tgk), lambda i, j: (i, jnp.minimum(j, nk - 1)))
    we_spec = pl.BlockSpec((tgk, Kp), lambda i, j: (jnp.minimum(j, nk - 1), 0))
    wd_spec = pl.BlockSpec((Kp, tg), lambda i, j: (0, jnp.maximum(j - nk, 0)))
    out_spec = pl.BlockSpec((tm, tg), lambda i, j: (i, jnp.maximum(j - nk, 0)))

    flops = 2 * B * (nk * tgk) * Kp + 2 * B * Kp * (ng * tg)
    bytes_accessed = (B * G * xsz                 # x read
                      + nb * (nk * tgk) * Kp * 2  # encoder weight per batch tile
                      + nb * Kp * (ng * tg) * 2   # decoder weight per batch tile
                      + B * G * osz)              # output write

    out = pl.pallas_call(
        kernel,
        out_shape=jax.ShapeDtypeStruct((B, G), out_dtype),
        grid_spec=pltpu.PrefetchScalarGridSpec(
            num_scalar_prefetch=0,
            grid=(nb, nk + ng),
            in_specs=[x_spec, we_spec, wd_spec],
            out_specs=out_spec,
            scratch_shapes=[
                pltpu.VMEM((tm, Kp), jnp.float32),    # f32 latent accumulator
                pltpu.VMEM((tm, Kp), compute_dtype),  # bf16 latent (decoder input)
            ],
        ),
        compiler_params=pltpu.CompilerParams(
            dimension_semantics=("parallel", "arbitrary"),
            vmem_limit_bytes=int(vmem_cap),
        ),
        cost_estimate=pl.CostEstimate(flops=flops, transcendentals=0,
                                      bytes_accessed=bytes_accessed),
    )(x, we_t, wd_t)
    return out


def _reference_forward_f32(x, w_enc, w_dec):
    h = jnp.maximum(x @ w_enc.T, 0.0)
    return jnp.maximum(h @ w_dec.T, 0.0)


def _reference_forward_bf16(x, w_enc, w_dec):
    xb = x.astype(jnp.bfloat16)
    web = w_enc.T.astype(jnp.bfloat16)
    wdb = w_dec.T.astype(jnp.bfloat16)
    h = jnp.maximum(jnp.dot(xb, web, preferred_element_type=jnp.float32), 0.0)
    y = jnp.dot(h.astype(jnp.bfloat16), wdb, preferred_element_type=jnp.float32)
    return jnp.maximum(y, 0.0)


if __name__ == "__main__":
    # Small, TPU-tile-friendly sizes: G genes, K TFs, B batch (ragged on purpose).
    B, G, K = 8, 256, 128

    key = jax.random.PRNGKey(0)
    k_mask, k_we, k_wd, k_x = jax.random.split(key, 4)

    # prior_network connectivity mask [G, K]: nonzero values are connections.
    prior_mask = (jax.random.uniform(k_mask, (G, K)) < 0.2).astype(jnp.float32)

    # Encoder Linear(G -> K, bias=False): weight [K, G], masked by prior (transposed).
    w_enc = jax.random.uniform(k_we, (K, G), minval=-0.1, maxval=0.1) * prior_mask.T
    # Decoder Linear(K -> G, bias=False): weight [G, K].
    w_dec = jax.random.uniform(k_wd, (G, K), minval=-0.1, maxval=0.1)

    x = jax.random.normal(k_x, (B, G), dtype=jnp.float32)

    # One-time weight prep (model-load time), then the fused forward.
    we_t, wd_t = prepare_tf_ae_weights(w_enc, w_dec)
    out = tf_autoencoder_forward(x, we_t, wd_t)
    out = jax.block_until_ready(out)

    ref_bf16 = _reference_forward_bf16(x, w_enc, w_dec)
    ref_f32 = _reference_forward_f32(x, w_enc, w_dec)

    assert out.shape == (B, G)
    assert out.dtype == x.dtype
    assert jnp.allclose(out, ref_bf16, atol=2e-3, rtol=2e-3)
    assert jnp.allclose(out, ref_f32, atol=5e-2, rtol=5e-2)

    # TODO(synk): training-mode input/hidden dropout and the n_time_steps>0 /
    # return_tfa=True / hidden_state branches of _forward are not implemented
    # (eval-mode static forward only).
    print("KERNEL_OK")
</pallas_src>

<mosaic_0001>
module attributes {stable_mosaic.version = 11 : i64} {
  func.func @kernel(%arg0: i32, %arg1: i32, %arg2: memref<16x512xf32, #tpu.memory_space<vmem>>, %arg3: memref<512x128xbf16, #tpu.memory_space<vmem>>, %arg4: memref<128x512xbf16, #tpu.memory_space<vmem>>, %arg5: memref<16x512xf32, #tpu.memory_space<vmem>>, %arg6: memref<16x128xf32, #tpu.memory_space<vmem>>, %arg7: memref<16x128xbf16, #tpu.memory_space<vmem>>) attributes {dimension_semantics = [#tpu.dimension_semantics<parallel>, #tpu.dimension_semantics<arbitrary>], iteration_bounds = array<i64: 1, 2>, scalar_prefetch = 0 : i64, scratch_operands = 2 : i64, tpu.core_type = #tpu.core_type<tc>, window_params = [{transform_indices = @transform_0, window_bounds = array<i64: 16, 512>}, {transform_indices = @transform_1, window_bounds = array<i64: 512, 128>}, {transform_indices = @transform_2, window_bounds = array<i64: 128, 512>}, {transform_indices = @transform_3, window_bounds = array<i64: 16, 512>}]} {
    %c0_i32 = arith.constant 0 : i32
    %0 = arith.cmpi eq, %arg1, %c0_i32 : i32
    %1 = arith.extui %0 : i1 to i32
    %c0_i32_0 = arith.constant 0 : i32
    %2 = arith.cmpi ne, %1, %c0_i32_0 : i32
    scf.if %2 {
      %cst = arith.constant 0.000000e+00 : f32
      %12 = vector.broadcast %cst : f32 to vector<16x128xf32>
      %c0 = arith.constant 0 : index
      %c0_6 = arith.constant 0 : index
      %13 = vector.load %arg6[%c0, %c0_6] : memref<16x128xf32, #tpu.memory_space<vmem>>, vector<16x128xf32>
      tpu.vector_store %arg6[%c0, %c0_6], %12 {strides = array<i32>} : memref<16x128xf32, #tpu.memory_space<vmem>>, vector<16x128xf32>,
    } else {
    }
    %c1_i32 = arith.constant 1 : i32
    %3 = arith.cmpi slt, %arg1, %c1_i32 : i32
    %4 = arith.extui %3 : i1 to i32
    %c0_i32_1 = arith.constant 0 : i32
    %5 = arith.cmpi ne, %4, %c0_i32_1 : i32
    scf.if %5 {
      %c0 = arith.constant 0 : index
      %c0_6 = arith.constant 0 : index
      %12 = vector.load %arg2[%c0, %c0_6] : memref<16x512xf32, #tpu.memory_space<vmem>>, vector<16x512xf32>
      %13 = tpu.iota {dimensions = array<i32: 1>} : vector<16x512xi32>
      %c0_i32_7 = arith.constant 0 : i32
      %14 = arith.cmpi eq, %arg1, %c0_i32_7 : i32
      %c256_i32 = arith.constant 256 : i32
      %c512_i32 = arith.constant 512 : i32
      %15 = arith.select %14, %c256_i32, %c512_i32 : i32
      %16 = vector.broadcast %15 : i32 to vector<16x512xi32>
      %17 = arith.cmpi slt, %13, %16 : vector<16x512xi32>
      %cst = arith.constant 0.000000e+00 : f32
      %18 = vector.broadcast %cst : f32 to vector<16x512xf32>
      %19 = arith.select %17, %12, %18 : vector<16x512xi1>, vector<16x512xf32>
      %c0_8 = arith.constant 0 : index
      %c0_9 = arith.constant 0 : index
      %20 = vector.load %arg6[%c0_8, %c0_9] : memref<16x128xf32, #tpu.memory_space<vmem>>, vector<16x128xf32>
      %21 = arith.truncf %19 : vector<16x512xf32> to vector<16x512xbf16>
      %c0_10 = arith.constant 0 : index
      %c0_11 = arith.constant 0 : index
      %22 = vector.load %arg3[%c0_10, %c0_11] : memref<512x128xbf16, #tpu.memory_space<vmem>>, vector<512x128xbf16>
      %cst_12 = arith.constant dense<0.000000e+00> : vector<16x128xf32>
      %23 = tpu.matmul %21, %22, %cst_12 {dimension_numbers = #tpu.dot_dimension_numbers<[1], [0], [0], [1], [0, 0, 1, 1], [], []>} : vector<16x512xbf16>, vector<512x128xbf16>, vector<16x128xf32> -> vector<16x128xf32>
      %24 = arith.addf %20, %23 : vector<16x128xf32>
      %c0_13 = arith.constant 0 : index
      %c0_14 = arith.constant 0 : index
      %25 = vector.load %arg6[%c0_13, %c0_14] : memref<16x128xf32, #tpu.memory_space<vmem>>, vector<16x128xf32>
      tpu.vector_store %arg6[%c0_13, %c0_14], %24 {strides = array<i32>} : memref<16x128xf32, #tpu.memory_space<vmem>>, vector<16x128xf32>,
    } else {
    }
    %c0_i32_2 = arith.constant 0 : i32
    %6 = arith.cmpi eq, %arg1, %c0_i32_2 : i32
    %7 = arith.extui %6 : i1 to i32
    %c0_i32_3 = arith.constant 0 : i32
    %8 = arith.cmpi ne, %7, %c0_i32_3 : i32
    scf.if %8 {
      %c0 = arith.constant 0 : index
      %c0_6 = arith.constant 0 : index
      %12 = vector.load %arg6[%c0, %c0_6] : memref<16x128xf32, #tpu.memory_space<vmem>>, vector<16x128xf32>
      %cst = arith.constant 0.000000e+00 : f32
      %13 = vector.broadcast %cst : f32 to vector<16x128xf32>
      %14 = arith.maximumf %12, %13 : vector<16x128xf32>
      %15 = arith.truncf %14 : vector<16x128xf32> to vector<16x128xbf16>
      %c0_7 = arith.constant 0 : index
      %c0_8 = arith.constant 0 : index
      %16 = vector.load %arg7[%c0_7, %c0_8] : memref<16x128xbf16, #tpu.memory_space<vmem>>, vector<16x128xbf16>
      tpu.vector_store %arg7[%c0_7, %c0_8], %15 {strides = array<i32>} : memref<16x128xbf16, #tpu.memory_space<vmem>>, vector<16x128xbf16>,
    } else {
    }
    %c1_i32_4 = arith.constant 1 : i32
    %9 = arith.cmpi sge, %arg1, %c1_i32_4 : i32
    %10 = arith.extui %9 : i1 to i32
    %c0_i32_5 = arith.constant 0 : i32
    %11 = arith.cmpi ne, %10, %c0_i32_5 : i32
    scf.if %11 {
      %c0 = arith.constant 0 : index
      %c0_6 = arith.constant 0 : index
      %12 = vector.load %arg7[%c0, %c0_6] : memref<16x128xbf16, #tpu.memory_space<vmem>>, vector<16x128xbf16>
      %c0_7 = arith.constant 0 : index
      %c0_8 = arith.constant 0 : index
      %13 = vector.load %arg4[%c0_7, %c0_8] : memref<128x512xbf16, #tpu.memory_space<vmem>>, vector<128x512xbf16>
      %cst = arith.constant dense<0.000000e+00> : vector<16x512xf32>
      %14 = tpu.matmul %12, %13, %cst {dimension_numbers = #tpu.dot_dimension_numbers<[1], [0], [0], [1], [0, 0, 1, 1], [], []>} : vector<16x128xbf16>, vector<128x512xbf16>, vector<16x512xf32> -> vector<16x512xf32>
      %cst_9 = arith.constant 0.000000e+00 : f32
      %15 = vector.broadcast %cst_9 : f32 to vector<16x512xf32>
      %16 = arith.maximumf %14, %15 : vector<16x512xf32>
      %c0_10 = arith.constant 0 : index
      %c0_11 = arith.constant 0 : index
      %17 = vector.load %arg5[%c0_10, %c0_11] : memref<16x512xf32, #tpu.memory_space<vmem>>, vector<16x512xf32>
      tpu.vector_store %arg5[%c0_10, %c0_11], %16 {strides = array<i32>} : memref<16x512xf32, #tpu.memory_space<vmem>>, vector<16x512xf32>,
    } else {
    }
    return
  }
  func.func @transform_0(%arg0: i32, %arg1: i32) -> (i32, i32) {
    %c0_i32 = arith.constant 0 : i32
    %0 = arith.minsi %arg1, %c0_i32 : i32
    %c0_i32_0 = arith.constant 0 : i32
    return %arg0, %0 : i32, i32
  }
  func.func @transform_1(%arg0: i32, %arg1: i32) -> (i32, i32) {
    %c0_i32 = arith.constant 0 : i32
    %0 = arith.minsi %arg1, %c0_i32 : i32
    %c0_i32_0 = arith.constant 0 : i32
    %c0_i32_1 = arith.constant 0 : i32
    return %0, %c0_i32_0 : i32, i32
  }
  func.func @transform_2(%arg0: i32, %arg1: i32) -> (i32, i32) {
    %c1_i32 = arith.constant 1 : i32
    %0 = arith.subi %arg1, %c1_i32 : i32
    %c0_i32 = arith.constant 0 : i32
    %1 = arith.maxsi %0, %c0_i32 : i32
    %c0_i32_0 = arith.constant 0 : i32
    %c0_i32_1 = arith.constant 0 : i32
    return %c0_i32_0, %1 : i32, i32
  }
  func.func @transform_3(%arg0: i32, %arg1: i32) -> (i32, i32) {
    %c1_i32 = arith.constant 1 : i32
    %0 = arith.subi %arg1, %c1_i32 : i32
    %c0_i32 = arith.constant 0 : i32
    %1 = arith.maxsi %0, %c0_i32 : i32
    %c0_i32_0 = arith.constant 0 : i32
    return %arg0, %1 : i32, i32
  }
}

</mosaic_0001>

<llo_original>
// kernel: tpu_custom_call.1
$region0: #{tpu_custom_call.1}
  #allocation0 [shape = 'u32[]', space=smem, size = 0x4, offset = 0x4, fixed_abs, tag = 'smem constant byte address 0x4 - core index']
  #allocation1 [shape = 'u32[144,128]{1,0:T(1,128)}', space=vmem, size = 0x12000, scoped, tag = 'internal scratch']
  #allocation2 [shape = 'f32[16,128]{1,0:T(8,128)}', space=vmem, size = 0x2000, scoped, tag = 'scratch operand']
  #allocation3 [shape = 'bf16[16,128]{1,0:T(16,128)(2,1)}', space=vmem, size = 0x1000, scoped, tag = 'scratch operand']
  %s0 = inlined_call_operand.hbm [shape: f32[8,256], index: 0, kind: input, shape index: {}]
  %s1 = inlined_call_operand.hbm [shape: bf16[512,128], index: 1, kind: input, shape index: {}]
  %s2 = inlined_call_operand.hbm [shape: bf16[128,512], index: 2, kind: input, shape index: {}]
  %s3 = inlined_call_operand.hbm [shape: f32[8,256], index: 3, kind: output, shape index: {}]
  %s4 = sld [smem:[#allocation0]]
  $region73: #{tpu_custom_call.1} parent=0
    _
  %s6 = ssub.s32 1, %s4
  %s7 = scalar_select 0, %s6, %s4
  $region1: #{tpu_custom_call.1} parent=0
    #allocation4 [shape = 'u8[65536]{0}', space=vmem, size = 0x10000, scoped, tag = 'input window, operand 0']
    #allocation5 [shape = 's32[2]{0}', space=sflag, size = 0x8, scoped, tag = 'scoped memory for tpu_custom_call.1']
    #allocation6 [shape = 's32[2]{0}', space=sflag, size = 0x8, scoped, tag = 'scoped memory for tpu_custom_call.1']
    #allocation7 [shape = 'u8[262144]{0}', space=vmem, size = 0x40000, scoped, tag = 'input window, operand 1']
    #allocation8 [shape = 's32[2]{0}', space=sflag, size = 0x8, scoped, tag = 'scoped memory for tpu_custom_call.1']
    #allocation9 [shape = 'u8[262144]{0}', space=vmem, size = 0x40000, scoped, tag = 'input window, operand 2']
    #allocation10 [shape = 'u8[65536]{0}', space=vmem, size = 0x10000, scoped, tag = 'output window, operand 0']
    %8 = vsyncpa [#allocation5], 0
    %s9 = scalar_lea.sflag [#allocation5], 1
    %10 = vsyncpa %s9, 0
    %11 = vsyncpa [#allocation8], 0
    %s12 = scalar_lea.sflag [#allocation8], 1
    %13 = vsyncpa %s12, 0
    %14 = vsyncpa [#allocation6], 0
    %s15 = scalar_lea.sflag [#allocation6], 1
    %16 = vsyncpa %s15, 0
    loop: start=0, step=1, limit=4
    $region2: #{tpu_custom_call.1} parent=1 // loop_pre_header
      _
    $region3: #{tpu_custom_call.1} parent=1 // loop_header
      %s18 = sphi 0, %s22
      %p19 = scmp.ge.s32.totalorder %s18, 4
      %s25 = sphi 0, %s37
      %s26 = sphi 0, %s33
      %s27 = sphi 0, %s25
      %s28 = sphi 0, %s26
      %s29 = sphi 0, %s27
      %s30 = sphi 0, %s28
      %s46 = sphi 0, %s48
      %s49 = sphi 0, %s46
      %s50 = sphi 0, %s49
      %s66 = sphi 0, %s50
      %s76 = sphi 0, %s78
      %s79 = sphi 0, %s76
      %s80 = sphi 0, %s79
      %s96 = sphi 0, %s80
      %s108 = sphi 0, %s110
      %s111 = sphi 0, %s108
      %s112 = sphi 0, %s111
      %s128 = sphi 0, %s112
      %s142 = sphi 0, %s144
      %s145 = sphi 0, %s142
      %s146 = sphi 0, %s145
      %s162 = sphi 0, %s146
    $region4: #{tpu_custom_call.1} parent=1 // loop_header_branch
      %21 = sbr.rel (%p19) target = $region8
    $region5: #{tpu_custom_call.1} parent=1 // loop_body
      %s23 = ssub.s32 %s18, 1
      %s24 = ssub.s32 %s18, 2
      %s31 = sadd.s32 1, %s26
      %p32 = scmp.ge.s32.totalorder %s31, 2
      %s33 = scalar_select %p32, 0, %s31
      %s34 = sadd.s32 1, %s25
      %s35 = scalar_select %p32, %s34, %s25
      %p36 = scmp.ge.s32.totalorder %s35, 1
      %s37 = scalar_select %p36, 0, %s35
      %p38 = scmp.lt.s32.totalorder %s26, 0
      %s39 = scalar_select %p38, %s26, 0
      %p40 = scmp.lt.s32.totalorder %s33, 0
      %s41 = scalar_select %p40, %s33, 0
      %s42 = ssub.s32 %s25, %s37
      %s43 = ssub.s32 %s39, %s41
      %s44 = sor.u32 %s42, %s43
      %p45 = scmp.eq.s32.totalorder %s44, 0
      %s47 = sadd.s32 %s46, 1
      %s48 = scalar_select %p45, %s46, %s47
      %p51 = pneg %p45
      %p52 = scmp.eq.s32.totalorder %s18, 1
      %p53 = por %p51, %p52
      %p54 = scmp.ne.s32.totalorder %s46, %s49
      %p55 = scmp.eq.s32.totalorder %s18, 0
      %p56 = por %p54, %p55
      %p57 = scmp.ne.s32.totalorder %s46, %s49
      %p58 = scmp.eq.s32.totalorder %s23, 1
      %p59 = por %p57, %p58
      %p60 = scmp.ne.s32.totalorder %s49, %s50
      %p61 = scmp.eq.s32.totalorder %s23, 0
      %p62 = por %p60, %p61
      %p63 = scmp.ne.s32.totalorder %s49, %s50
      %p64 = scmp.eq.s32.totalorder %s24, 1
      %p65 = por %p63, %p64
      %p67 = scmp.ne.s32.totalorder %s50, %s66
      %p68 = scmp.eq.s32.totalorder %s24, 0
      %p69 = por %p67, %p68
      %p70 = scmp.lt.s32.totalorder %s26, 0
      %s71 = scalar_select %p70, %s26, 0
      %p72 = scmp.lt.s32.totalorder %s33, 0
      %s73 = scalar_select %p72, %s33, 0
      %s74 = ssub.s32 %s71, %s73
      %p75 = scmp.eq.s32.totalorder %s74, 0
      %s77 = sadd.s32 %s76, 1
      %s78 = scalar_select %p75, %s76, %s77
      %p81 = pneg %p75
      %p82 = scmp.eq.s32.totalorder %s18, 1
      %p83 = por %p81, %p82
      %p84 = scmp.ne.s32.totalorder %s76, %s79
      %p85 = scmp.eq.s32.totalorder %s18, 0
      %p86 = por %p84, %p85
      %p87 = scmp.ne.s32.totalorder %s76, %s79
      %p88 = scmp.eq.s32.totalorder %s23, 1
      %p89 = por %p87, %p88
      %p90 = scmp.ne.s32.totalorder %s79, %s80
      %p91 = scmp.eq.s32.totalorder %s23, 0
      %p92 = por %p90, %p91
      %p93 = scmp.ne.s32.totalorder %s79, %s80
      %p94 = scmp.eq.s32.totalorder %s24, 1
      %p95 = por %p93, %p94
      %p97 = scmp.ne.s32.totalorder %s80, %s96
      %p98 = scmp.eq.s32.totalorder %s24, 0
      %p99 = por %p97, %p98
      %s100 = ssub.s32 %s26, 1
      %p101 = scmp.gt.s32.totalorder %s100, 0
      %s102 = scalar_select %p101, %s100, 0
      %s103 = ssub.s32 %s33, 1
      %p104 = scmp.gt.s32.totalorder %s103, 0
      %s105 = scalar_select %p104, %s103, 0
      %s106 = ssub.s32 %s102, %s105
      %p107 = scmp.eq.s32.totalorder %s106, 0
      %s109 = sadd.s32 %s108, 1
      %s110 = scalar_select %p107, %s108, %s109
      %p113 = pneg %p107
      %p114 = scmp.eq.s32.totalorder %s18, 1
      %p115 = por %p113, %p114
      %p116 = scmp.ne.s32.totalorder %s108, %s111
      %p117 = scmp.eq.s32.totalorder %s18, 0
      %p118 = por %p116, %p117
      %p119 = scmp.ne.s32.totalorder %s108, %s111
      %p120 = scmp.eq.s32.totalorder %s23, 1
      %p121 = por %p119, %p120
      %p122 = scmp.ne.s32.totalorder %s111, %s112
      %p123 = scmp.eq.s32.totalorder %s23, 0
      %p124 = por %p122, %p123
      %p125 = scmp.ne.s32.totalorder %s111, %s112
      %p126 = scmp.eq.s32.totalorder %s24, 1
      %p127 = por %p125, %p126
      %p129 = scmp.ne.s32.totalorder %s112, %s128
      %p130 = scmp.eq.s32.totalorder %s24, 0
      %p131 = por %p129, %p130
      %s132 = ssub.s32 %s26, 1
      %p133 = scmp.gt.s32.totalorder %s132, 0
      %s134 = scalar_select %p133, %s132, 0
      %s135 = ssub.s32 %s33, 1
      %p136 = scmp.gt.s32.totalorder %s135, 0
      %s137 = scalar_select %p136, %s135, 0
      %s138 = ssub.s32 %s25, %s37
      %s139 = ssub.s32 %s134, %s137
      %s140 = sor.u32 %s138, %s139
      %p141 = scmp.eq.s32.totalorder %s140, 0
      %s143 = sadd.s32 %s142, 1
      %s144 = scalar_select %p141, %s142, %s143
      %p147 = pneg %p141
      %p148 = scmp.eq.s32.totalorder %s18, 1
      %p149 = por %p147, %p148
      %p150 = scmp.ne.s32.totalorder %s142, %s145
      %p151 = scmp.eq.s32.totalorder %s18, 0
      %p152 = por %p150, %p151
      %p153 = scmp.ne.s32.totalorder %s142, %s145
      %p154 = scmp.eq.s32.totalorder %s23, 1
      %p155 = por %p153, %p154
      %p156 = scmp.ne.s32.totalorder %s145, %s146
      %p157 = scmp.eq.s32.totalorder %s23, 0
      %p158 = por %p156, %p157
      %p159 = scmp.ne.s32.totalorder %s145, %s146
      %p160 = scmp.eq.s32.totalorder %s24, 1
      %p161 = por %p159, %p160
      %p163 = scmp.ne.s32.totalorder %s146, %s162
      %p164 = scmp.eq.s32.totalorder %s24, 0
      %p165 = por %p163, %p164
      %p166 = scmp.le.s32.totalorder 1, %s18
      %p167 = scmp.lt.s32.totalorder %s18, 3
      %p168 = pnand %p166, %p167
      %p169 = pneg %p168
      // Predicated region
      $region9: #{tpu_custom_call.1} parent=5 // pred_check
        _
      $region10: #{tpu_custom_call.1} parent=5 // pred_check_branch
        %171 = sbr.rel (%p168) target = $region12
      $region11: #{tpu_custom_call.1} parent=5 // pred_region
        %s172 = ssub.s32 %s18, 1
      $region12: #{tpu_custom_call.1} parent=5 // pred_fallthru
        _
      %p173 = scmp.lt.s32.totalorder %s18, 2
      // Predicated region
      $region13: #{tpu_custom_call.1} parent=5 // pred_check
        %p174 = pneg %p173
      $region14: #{tpu_custom_call.1} parent=5 // pred_check_branch
        %176 = sbr.rel (%p174) target = $region16
      $region15: #{tpu_custom_call.1} parent=5 // pred_region
        // Predicated region
        $region17: #{tpu_custom_call.1} parent=15 // pred_check
          %p177 = pneg %p56
        $region18: #{tpu_custom_call.1} parent=15 // pred_check_branch
          %179 = sbr.rel (%p177) target = $region20
        $region19: #{tpu_custom_call.1} parent=15 // pred_region
          %s180 = sand.u32 %s46, 1
          %s181 = scalar_lea.sflag [#allocation5], %s180
          %s182 = sand.u32 %s46, 1
          %s183 = smul.addr %s182, 64
          %s184 = scalar_lea.vmem [#allocation4], %s183
          %p185 = scmp.lt.s32.totalorder %s26, 0
          %s186 = scalar_select %p185, %s26, 0
          %s187 = smul.u32 2, %s25
          %s188 = smul.u32 4, %s186
          %s189 = ssub.s32 1, %s187
          %s190 = smul.u32 128, %s189
          %s191 = ssub.s32 2, %s188
          %s192 = smul.u32 %s190, %s191
          %s194 = ssub.s32 1024, %s192
          %195 = vsyncadd %s181, %s194
          %p196 = scmp.ne.s32.totalorder 0, %s192
          %s197 = smul.addr %s187, 2
          %s198 = sadd.s32 %s188, %s197
          %s199 = smul.addr %s198, 128
          %s200 = scalar_lea.hbm %s0, %s199
          %s201 = smul.u32 %s191, 8
          %s202 = smul.u32 %s201, %s189
          %s203 = sshll.u32 %s184, 4
          %s204 = int_to_ptr.vmem [resolvable:$true] %s203
          %s205 = sshll.u32 %s202, 4
          %209 = dma.hbm_to_vmem [thread:$0]  (%p196), %s200, %s205, %s204, %s181, 256, 512, %s201
        $region20: #{tpu_custom_call.1} parent=15 // pred_fallthru
          _
        // Predicated region
        $region21: #{tpu_custom_call.1} parent=15 // pred_check
          %p210 = pneg %p86
        $region22: #{tpu_custom_call.1} parent=15 // pred_check_branch
          %212 = sbr.rel (%p210) target = $region24
        $region23: #{tpu_custom_call.1} parent=15 // pred_region
          %s213 = sand.u32 %s18, 1
          %s214 = scalar_lea.sflag [#allocation8], %s213
          %s215 = sand.u32 %s76, 1
          %s216 = smul.addr %s215, 256
          %s217 = scalar_lea.vmem [#allocation7], %s216
          %p218 = scmp.lt.s32.totalorder %s26, 0
          %s219 = scalar_select %p218, %s26, 0
          %s220 = smul.u32 64, %s219
          %s222 = ssub.s32 4096, 4096
          %223 = vsyncadd %s214, %s222
          %s224 = smul.addr %s220, 64
          %s225 = scalar_lea.hbm %s1, %s224
          %s226 = sshll.u32 %s217, 4
          %s227 = int_to_ptr.vmem [resolvable:$true] %s226
          %232 = dma.hbm_to_vmem [thread:$0]  %s225, 4096, %s227, %s214, 64, 64, 4
        $region24: #{tpu_custom_call.1} parent=15 // pred_fallthru
          _
        // Predicated region
        $region25: #{tpu_custom_call.1} parent=15 // pred_check
          %p233 = pneg %p118
        $region26: #{tpu_custom_call.1} parent=15 // pred_check_branch
          %235 = sbr.rel (%p233) target = $region28
        $region27: #{tpu_custom_call.1} parent=15 // pred_region
          %s236 = sand.u32 %s18, 1
          %s237 = scalar_lea.sflag [#allocation8], %s236
          %s238 = sand.u32 %s108, 1
          %s239 = smul.addr %s238, 256
          %s240 = scalar_lea.vmem [#allocation9], %s239
          %s241 = ssub.s32 %s26, 1
          %p242 = scmp.gt.s32.totalorder %s241, 0
          %s243 = scalar_select %p242, %s241, 0
          %s244 = smul.u32 4, %s243
          %s246 = ssub.s32 4096, 4096
          %247 = vsyncadd %s237, %s246
          %s248 = smul.addr %s244, 64
          %s249 = scalar_lea.hbm %s2, %s248
          %s250 = sshll.u32 %s240, 4
          %s251 = int_to_ptr.vmem [resolvable:$true] %s250
          %256 = dma.hbm_to_vmem [thread:$0]  %s249, 4096, %s251, %s237, 256, 256, 16
        $region28: #{tpu_custom_call.1} parent=15 // pred_fallthru
          _
      $region16: #{tpu_custom_call.1} parent=5 // pred_fallthru
        _
      %p257 = scmp.le.s32.totalorder 1, %s18
      %p258 = scmp.lt.s32.totalorder %s18, 3
      %p259 = pnand %p257, %p258
      %p260 = pneg %p259
      // Predicated region
      $region29: #{tpu_custom_call.1} parent=5 // pred_check
        _
      $region30: #{tpu_custom_call.1} parent=5 // pred_check_branch
        %262 = sbr.rel (%p259) target = $region32
      $region31: #{tpu_custom_call.1} parent=5 // pred_region
        %s263 = ssub.s32 %s18, 1
        %s264 = sand.u32 %s49, 1
        %s265 = scalar_lea.sflag [#allocation5], %s264
        %s266 = sand.u32 %s49, 1
        %s267 = smul.addr %s266, 64
        %s268 = scalar_lea.vmem [#allocation4], %s267
        // Predicated region
        $region33: #{tpu_custom_call.1} parent=31 // pred_check
          %p269 = pneg %p62
        $region34: #{tpu_custom_call.1} parent=31 // pred_check_branch
          %271 = sbr.rel (%p269) target = $region36
        $region35: #{tpu_custom_call.1} parent=31 // pred_region
          %272 = dma.done %s265, 1024
        $region36: #{tpu_custom_call.1} parent=31 // pred_fallthru
          _
        %s273 = sand.u32 %s23, 1
        %s274 = scalar_lea.sflag [#allocation8], %s273
        %s275 = sand.u32 %s79, 1
        %s276 = smul.addr %s275, 256
        %s277 = scalar_lea.vmem [#allocation7], %s276
        // Predicated region
        $region37: #{tpu_custom_call.1} parent=31 // pred_check
          %p278 = pneg %p92
        $region38: #{tpu_custom_call.1} parent=31 // pred_check_branch
          %280 = sbr.rel (%p278) target = $region40
        $region39: #{tpu_custom_call.1} parent=31 // pred_region
          %281 = dma.done %s274, 4096
        $region40: #{tpu_custom_call.1} parent=31 // pred_fallthru
          _
        %s282 = sand.u32 %s23, 1
        %s283 = scalar_lea.sflag [#allocation8], %s282
        %s284 = sand.u32 %s111, 1
        %s285 = smul.addr %s284, 256
        %s286 = scalar_lea.vmem [#allocation9], %s285
        // Predicated region
        $region41: #{tpu_custom_call.1} parent=31 // pred_check
          %p287 = pneg %p124
        $region42: #{tpu_custom_call.1} parent=31 // pred_check_branch
          %289 = sbr.rel (%p287) target = $region44
        $region43: #{tpu_custom_call.1} parent=31 // pred_region
          %290 = dma.done %s283, 4096
        $region44: #{tpu_custom_call.1} parent=31 // pred_fallthru
          _
        %s291 = sand.u32 %s49, 1
        %s292 = scalar_lea.sflag [#allocation5], %s291
        %s293 = sand.u32 %s49, 1
        %s294 = smul.addr %s293, 64
        %s295 = scalar_lea.vmem [#allocation4], %s294
        %p296 = pneg %p62
        %p297 = pneg %p59
        %s298 = sand.u32 %s23, 1
        %s299 = scalar_lea.sflag [#allocation8], %s298
        %s300 = sand.u32 %s79, 1
        %s301 = smul.addr %s300, 256
        %s302 = scalar_lea.vmem [#allocation7], %s301
        %p303 = pneg %p92
        %p304 = pneg %p89
        %s305 = sand.u32 %s23, 1
        %s306 = scalar_lea.sflag [#allocation8], %s305
        %s307 = sand.u32 %s111, 1
        %s308 = smul.addr %s307, 256
        %s309 = scalar_lea.vmem [#allocation9], %s308
        %p310 = pneg %p124
        %p311 = pneg %p121
        %p312 = pneg %p158
        %p313 = pneg %p155
        %s314 = sand.u32 %s145, 1
        %s315 = scalar_lea.sflag [#allocation6], %s314
        %s316 = sand.u32 %s145, 1
        %s317 = smul.addr %s316, 64
        %s318 = scalar_lea.vmem [#allocation10], %s317
        %p319 = scmp.lt.s32.totalorder %s28, 0
        %s320 = scalar_select %p319, %s28, 0
        %s321 = smul.u32 2, %s27
        %s322 = smul.u32 4, %s320
        %s323 = ssub.s32 1, %s321
        %s324 = smul.u32 128, %s323
        %s325 = ssub.s32 2, %s322
        %s326 = smul.u32 %s324, %s325
        %p327 = scmp.lt.s32.totalorder %s28, 0
        %s328 = scalar_select %p327, %s28, 0
        %s329 = smul.u32 64, %s328
        %s330 = ssub.s32 %s28, 1
        %p331 = scmp.gt.s32.totalorder %s330, 0
        %s332 = scalar_select %p331, %s330, 0
        %s333 = smul.u32 4, %s332
        %s334 = ssub.s32 %s28, 1
        %p335 = scmp.gt.s32.totalorder %s334, 0
        %s336 = scalar_select %p335, %s334, 0
        %s337 = smul.u32 2, %s27
        %s338 = smul.u32 4, %s336
        %s339 = ssub.s32 1, %s337
        %s340 = smul.u32 128, %s339
        %s341 = ssub.s32 2, %s338
        %s342 = smul.u32 %s340, %s341
        %p344 = scmp.eq.s32.totalorder %s28, 0
        // Predicated region
        $region45: #{tpu_custom_call.1} parent=31 // pred_check
          %p345 = pneg %p344
        $region46: #{tpu_custom_call.1} parent=31 // pred_check_branch
          %347 = sbr.rel (%p345) target = $region48
        $region47: #{tpu_custom_call.1} parent=31 // pred_region
          %348 = vst [vmem:[#allocation2] sm:$0xff] 0.0
          %349 = vst [vmem:[#allocation2 + $0x8] sm:$0xff] 0.0
        $region48: #{tpu_custom_call.1} parent=31 // pred_fallthru
          _
        %p350 = scmp.lt.s32.totalorder %s28, 1
        // Predicated region
        $region49: #{tpu_custom_call.1} parent=31 // pred_check
          %p351 = pneg %p350
        $region50: #{tpu_custom_call.1} parent=31 // pred_check_branch
          %353 = sbr.rel (%p351) target = $region52
        $region51: #{tpu_custom_call.1} parent=31 // pred_region
          %v354 = vld [vmem:[%s268] sm:$0xff]
          %v355 = vld [vmem:[%s268 + $0x8] sm:$0xff]
          %v356 = vld [vmem:[%s268 + $0x10] sm:$0xff]
          %v357 = vld [vmem:[%s268 + $0x18] sm:$0xff]
          %v358 = vld [vmem:[%s268 + $0x20] sm:$0xff]
          %v359 = vld [vmem:[%s268 + $0x28] sm:$0xff]
          %v360 = vld [vmem:[%s268 + $0x30] sm:$0xff]
          %v361 = vld [vmem:[%s268 + $0x38] sm:$0xff]
          %v362 = vlaneseq
          %v363 = vand.u32 %v362, 127
          %v364 = vadd.s32 %v363, 128
          %v365 = vadd.s32 %v363, 256
          %v366 = vadd.s32 %v363, 384
          %s367 = scalar_select %p344, 256, 512
          %v368 = vstv %s367
          %vm369 = vcmp.lt.s32.totalorder %v363, %v368
          %vm370 = vcmp.lt.s32.totalorder %v364, %v368
          %vm371 = vcmp.lt.s32.totalorder %v365, %v368
          %vm372 = vcmp.lt.s32.totalorder %v366, %v368
          %v373 = vsel %vm369, %v354, 0.0
          %v374 = vsel %vm370, %v355, 0.0
          %v375 = vsel %vm371, %v356, 0.0
          %v376 = vsel %vm372, %v357, 0.0
          %v377 = vsel %vm369, %v358, 0.0
          %v378 = vsel %vm370, %v359, 0.0
          %v379 = vsel %vm371, %v360, 0.0
          %v380 = vsel %vm372, %v361, 0.0
          %v381 = vld [vmem:[#allocation2] sm:$0xff]
          %v382 = vld [vmem:[#allocation2 + $0x8] sm:$0xff]
          %v383 = vpack.c.bf16 %v377, %v373
          %v384 = vpack.c.bf16 %v378, %v374
          %v385 = vpack.c.bf16 %v379, %v375
          %v386 = vpack.c.bf16 %v380, %v376
          %v387 = vld [vmem:[%s277] sm:$0xf]
          %v388 = vld [vmem:[%s277 + $0x4] sm:$0xf]
          %v389 = vld [vmem:[%s277 + $0x8] sm:$0xf]
          %v390 = vld [vmem:[%s277 + $0xc] sm:$0xf]
          %v391 = vld [vmem:[%s277 + $0x10] sm:$0xf]
          %v392 = vld [vmem:[%s277 + $0x14] sm:$0xf]
          %v393 = vld [vmem:[%s277 + $0x18] sm:$0xf]
          %v394 = vld [vmem:[%s277 + $0x1c] sm:$0xf]
          %v395 = vld [vmem:[%s277 + $0x20] sm:$0xf]
          %v396 = vld [vmem:[%s277 + $0x24] sm:$0xf]
          %v397 = vld [vmem:[%s277 + $0x28] sm:$0xf]
          %v398 = vld [vmem:[%s277 + $0x2c] sm:$0xf]
          %v399 = vld [vmem:[%s277 + $0x30] sm:$0xf]
          %v400 = vld [vmem:[%s277 + $0x34] sm:$0xf]
          %v401 = vld [vmem:[%s277 + $0x38] sm:$0xf]
          %v402 = vld [vmem:[%s277 + $0x3c] sm:$0xf]
          %v403 = vld [vmem:[%s277 + $0x40] sm:$0xf]
          %v404 = vld [vmem:[%s277 + $0x44] sm:$0xf]
          %v405 = vld [vmem:[%s277 + $0x48] sm:$0xf]
          %v406 = vld [vmem:[%s277 + $0x4c] sm:$0xf]
          %v407 = vld [vmem:[%s277 + $0x50] sm:$0xf]
          %v408 = vld [vmem:[%s277 + $0x54] sm:$0xf]
          %v409 = vld [vmem:[%s277 + $0x58] sm:$0xf]
          %v410 = vld [vmem:[%s277 + $0x5c] sm:$0xf]
          %v411 = vld [vmem:[%s277 + $0x60] sm:$0xf]
          %v412 = vld [vmem:[%s277 + $0x64] sm:$0xf]
          %v413 = vld [vmem:[%s277 + $0x68] sm:$0xf]
          %v414 = vld [vmem:[%s277 + $0x6c] sm:$0xf]
          %v415 = vld [vmem:[%s277 + $0x70] sm:$0xf]
          %v416 = vld [vmem:[%s277 + $0x74] sm:$0xf]
          %v417 = vld [vmem:[%s277 + $0x78] sm:$0xf]
          %v418 = vld [vmem:[%s277 + $0x7c] sm:$0xf]
          %v419 = vld [vmem:[%s277 + $0x80] sm:$0xf]
          %v420 = vld [vmem:[%s277 + $0x84] sm:$0xf]
          %v421 = vld [vmem:[%s277 + $0x88] sm:$0xf]
          %v422 = vld [vmem:[%s277 + $0x8c] sm:$0xf]
          %v423 = vld [vmem:[%s277 + $0x90] sm:$0xf]
          %v424 = vld [vmem:[%s277 + $0x94] sm:$0xf]
          %v425 = vld [vmem:[%s277 + $0x98] sm:$0xf]
          %v426 = vld [vmem:[%s277 + $0x9c] sm:$0xf]
          %v427 = vld [vmem:[%s277 + $0xa0] sm:$0xf]
          %v428 = vld [vmem:[%s277 + $0xa4] sm:$0xf]
          %v429 = vld [vmem:[%s277 + $0xa8] sm:$0xf]
          %v430 = vld [vmem:[%s277 + $0xac] sm:$0xf]
          %v431 = vld [vmem:[%s277 + $0xb0] sm:$0xf]
          %v432 = vld [vmem:[%s277 + $0xb4] sm:$0xf]
          %v433 = vld [vmem:[%s277 + $0xb8] sm:$0xf]
          %v434 = vld [vmem:[%s277 + $0xbc] sm:$0xf]
          %v435 = vld [vmem:[%s277 + $0xc0] sm:$0xf]
          %v436 = vld [vmem:[%s277 + $0xc4] sm:$0xf]
          %v437 = vld [vmem:[%s277 + $0xc8] sm:$0xf]
          %v438 = vld [vmem:[%s277 + $0xcc] sm:$0xf]
          %v439 = vld [vmem:[%s277 + $0xd0] sm:$0xf]
          %v440 = vld [vmem:[%s277 + $0xd4] sm:$0xf]
          %v441 = vld [vmem:[%s277 + $0xd8] sm:$0xf]
          %v442 = vld [vmem:[%s277 + $0xdc] sm:$0xf]
          %v443 = vld [vmem:[%s277 + $0xe0] sm:$0xf]
          %v444 = vld [vmem:[%s277 + $0xe4] sm:$0xf]
          %v445 = vld [vmem:[%s277 + $0xe8] sm:$0xf]
          %v446 = vld [vmem:[%s277 + $0xec] sm:$0xf]
          %v447 = vld [vmem:[%s277 + $0xf0] sm:$0xf]
          %v448 = vld [vmem:[%s277 + $0xf4] sm:$0xf]
          %v449 = vld [vmem:[%s277 + $0xf8] sm:$0xf]
          %v450 = vld [vmem:[%s277 + $0xfc] sm:$0xf]
          %v515 = vunpack.c.l.b16 %v387
          %v516 = vunpack.c.l.b16 %v388
          %v517 = vunpack.c.l.b16 %v389
          %v518 = vunpack.c.l.b16 %v390
          %v519 = vunpack.c.l.b16 %v391
          %v520 = vunpack.c.l.b16 %v392
          %v521 = vunpack.c.l.b16 %v393
          %v522 = vunpack.c.l.b16 %v394
          %v523 = vunpack.c.l.b16 %v395
          %v524 = vunpack.c.l.b16 %v396
          %v525 = vunpack.c.l.b16 %v397
          %v526 = vunpack.c.l.b16 %v398
          %v527 = vunpack.c.l.b16 %v399
          %v528 = vunpack.c.l.b16 %v400
          %v529 = vunpack.c.l.b16 %v401
          %v530 = vunpack.c.l.b16 %v402
          %v531 = vunpack.c.l.b16 %v403
          %v532 = vunpack.c.l.b16 %v404
          %v533 = vunpack.c.l.b16 %v405
          %v534 = vunpack.c.l.b16 %v406
          %v535 = vunpack.c.l.b16 %v407
          %v536 = vunpack.c.l.b16 %v408
          %v537 = vunpack.c.l.b16 %v409
          %v538 = vunpack.c.l.b16 %v410
          %v539 = vunpack.c.l.b16 %v411
          %v540 = vunpack.c.l.b16 %v412
          %v541 = vunpack.c.l.b16 %v413
          %v542 = vunpack.c.l.b16 %v414
          %v543 = vunpack.c.l.b16 %v415
          %v544 = vunpack.c.l.b16 %v416
          %v545 = vunpack.c.l.b16 %v417
          %v546 = vunpack.c.l.b16 %v418
          %v547 = vunpack.c.l.b16 %v419
          %v548 = vunpack.c.l.b16 %v420
          %v549 = vunpack.c.l.b16 %v421
          %v550 = vunpack.c.l.b16 %v422
          %v551 = vunpack.c.l.b16 %v423
          %v552 = vunpack.c.l.b16 %v424
          %v553 = vunpack.c.l.b16 %v425
          %v554 = vunpack.c.l.b16 %v426
          %v555 = vunpack.c.l.b16 %v427
          %v556 = vunpack.c.l.b16 %v428
          %v557 = vunpack.c.l.b16 %v429
          %v558 = vunpack.c.l.b16 %v430
          %v559 = vunpack.c.l.b16 %v431
          %v560 = vunpack.c.l.b16 %v432
          %v561 = vunpack.c.l.b16 %v433
          %v562 = vunpack.c.l.b16 %v434
          %v563 = vunpack.c.l.b16 %v435
          %v564 = vunpack.c.l.b16 %v436
          %v565 = vunpack.c.l.b16 %v437
          %v566 = vunpack.c.l.b16 %v438
          %v567 = vunpack.c.l.b16 %v439
          %v568 = vunpack.c.l.b16 %v440
          %v569 = vunpack.c.l.b16 %v441
          %v570 = vunpack.c.l.b16 %v442
          %v571 = vunpack.c.l.b16 %v443
          %v572 = vunpack.c.l.b16 %v444
          %v573 = vunpack.c.l.b16 %v445
          %v574 = vunpack.c.l.b16 %v446
          %v575 = vunpack.c.l.b16 %v447
          %v576 = vunpack.c.l.b16 %v448
          %v577 = vunpack.c.l.b16 %v449
          %v578 = vunpack.c.l.b16 %v450
          %v579 = vpack.c.b16 %v516, %v515
          %v580 = vpack.c.b16 %v518, %v517
          %v581 = vpack.c.b16 %v520, %v519
          %v582 = vpack.c.b16 %v522, %v521
          %v583 = vpack.c.b16 %v524, %v523
          %v584 = vpack.c.b16 %v526, %v525
          %v585 = vpack.c.b16 %v528, %v527
          %v586 = vpack.c.b16 %v530, %v529
          %v587 = vpack.c.b16 %v532, %v531
          %v588 = vpack.c.b16 %v534, %v533
          %v589 = vpack.c.b16 %v536, %v535
          %v590 = vpack.c.b16 %v538, %v537
          %v591 = vpack.c.b16 %v540, %v539
          %v592 = vpack.c.b16 %v542, %v541
          %v593 = vpack.c.b16 %v544, %v543
          %v594 = vpack.c.b16 %v546, %v545
          %v595 = vpack.c.b16 %v548, %v547
          %v596 = vpack.c.b16 %v550, %v549
          %v597 = vpack.c.b16 %v552, %v551
          %v598 = vpack.c.b16 %v554, %v553
          %v599 = vpack.c.b16 %v556, %v555
          %v600 = vpack.c.b16 %v558, %v557
          %v601 = vpack.c.b16 %v560, %v559
          %v602 = vpack.c.b16 %v562, %v561
          %v603 = vpack.c.b16 %v564, %v563
          %v604 = vpack.c.b16 %v566, %v565
          %v605 = vpack.c.b16 %v568, %v567
          %v606 = vpack.c.b16 %v570, %v569
          %v607 = vpack.c.b16 %v572, %v571
          %v608 = vpack.c.b16 %v574, %v573
          %v609 = vpack.c.b16 %v576, %v575
          %v610 = vpack.c.b16 %v578, %v577
          %643 = vmatprep.subr.bf16.mxu0 0
          %644 = vmatpush1.bf16.msra.mxu0 %v579
          %645 = vmatprep.subr.bf16.mxu0 0
          %646 = vmatpush1.bf16.msra.mxu0 %v580
          %647 = vmatprep.subr.bf16.mxu0 0
          %648 = vmatpush1.bf16.msra.mxu0 %v581
          %649 = vmatprep.subr.bf16.mxu0 0
          %650 = vmatpush1.bf16.msra.mxu0 %v582
          %651 = vmatprep.subr.bf16.mxu0 0
          %652 = vmatpush1.bf16.msra.mxu0 %v583
          %653 = vmatprep.subr.bf16.mxu0 0
          %654 = vmatpush1.bf16.msra.mxu0 %v584
          %655 = vmatprep.subr.bf16.mxu0 0
          %656 = vmatpush1.bf16.msra.mxu0 %v585
          %657 = vmatprep.subr.bf16.mxu0 0
          %658 = vmatpush1.bf16.msra.mxu0 %v586
          %659 = vmatprep.subr.bf16.mxu0 0
          %660 = vmatpush1.bf16.msra.mxu0 %v587
          %661 = vmatprep.subr.bf16.mxu0 0
          %662 = vmatpush1.bf16.msra.mxu0 %v588
          %663 = vmatprep.subr.bf16.mxu0 0
          %664 = vmatpush1.bf16.msra.mxu0 %v589
          %665 = vmatprep.subr.bf16.mxu0 0
          %666 = vmatpush1.bf16.msra.mxu0 %v590
          %667 = vmatprep.subr.bf16.mxu0 0
          %668 = vmatpush1.bf16.msra.mxu0 %v591
          %669 = vmatprep.subr.bf16.mxu0 0
          %670 = vmatpush1.bf16.msra.mxu0 %v592
          %671 = vmatprep.subr.bf16.mxu0 0
          %672 = vmatpush1.bf16.msra.mxu0 %v593
          %673 = vmatprep.subr.bf16.mxu0 0
          %674 = vmatpush1.bf16.msra.mxu0 %v594
          %675 = vmatprep.mubr.bf16.mxu0 %v384
          %676 = vmatmul.mubr.bf16.gmra.mrb[0].mxu0 %v383
          %v677 = vpop.f32.mrb[0].mxu0
          %v678 = vadd.f32 0.0, %v677
          %v679 = vpop.f32.mrb[0].mxu0
          %v680 = vpop.f32.mrb[0].mxu0
          %v681 = vadd.f32 0.0, %v680
          %v682 = vpop.f32.mrb[0].mxu0
          %683 = vdwg.mxu0
          %684 = vmatprep.subr.bf16.mxu0 0
          %685 = vmatpush1.bf16.msra.mxu0 %v595
          %686 = vmatprep.subr.bf16.mxu0 0
          %687 = vmatpush1.bf16.msra.mxu0 %v596
          %688 = vmatprep.subr.bf16.mxu0 0
          %689 = vmatpush1.bf16.msra.mxu0 %v597
          %690 = vmatprep.subr.bf16.mxu0 0
          %691 = vmatpush1.bf16.msra.mxu0 %v598
          %692 = vmatprep.subr.bf16.mxu0 0
          %693 = vmatpush1.bf16.msra.mxu0 %v599
          %694 = vmatprep.subr.bf16.mxu0 0
          %695 = vmatpush1.bf16.msra.mxu0 %v600
          %696 = vmatprep.subr.bf16.mxu0 0
          %697 = vmatpush1.bf16.msra.mxu0 %v601
          %698 = vmatprep.subr.bf16.mxu0 0
          %699 = vmatpush1.bf16.msra.mxu0 %v602
          %700 = vmatprep.subr.bf16.mxu0 0
          %701 = vmatpush1.bf16.msra.mxu0 %v603
          %702 = vmatprep.subr.bf16.mxu0 0
          %703 = vmatpush1.bf16.msra.mxu0 %v604
          %704 = vmatprep.subr.bf16.mxu0 0
          %705 = vmatpush1.bf16.msra.mxu0 %v605
          %706 = vmatprep.subr.bf16.mxu0 0
          %707 = vmatpush1.bf16.msra.mxu0 %v606
          %708 = vmatprep.subr.bf16.mxu0 0
          %709 = vmatpush1.bf16.msra.mxu0 %v607
          %710 = vmatprep.subr.bf16.mxu0 0
          %711 = vmatpush1.bf16.msra.mxu0 %v608
          %712 = vmatprep.subr.bf16.mxu0 0
          %713 = vmatpush1.bf16.msra.mxu0 %v609
          %714 = vmatprep.subr.bf16.mxu0 0
          %715 = vmatpush1.bf16.msra.mxu0 %v610
          %716 = vmatprep.mubr.bf16.mxu0 %v386
          %717 = vmatmul.mubr.bf16.gmra.mrb[0].mxu0 %v385
          %v718 = vpop.f32.mrb[0].mxu0
          %v719 = vadd.f32 %v678, %v718
          %v720 = vpop.f32.mrb[0].mxu0
          %v721 = vpop.f32.mrb[0].mxu0
          %v722 = vadd.f32 %v681, %v721
          %v723 = vpop.f32.mrb[0].mxu0
          %724 = vdwg.mxu0
          %v725 = vadd.f32 %v381, %v719
          %v726 = vadd.f32 %v382, %v722
          %727 = vst [vmem:[#allocation2] sm:$0xff] %v725
          %728 = vst [vmem:[#allocation2 + $0x8] sm:$0xff] %v726
        $region52: #{tpu_custom_call.1} parent=31 // pred_fallthru
          _
        // Predicated region
        $region53: #{tpu_custom_call.1} parent=31 // pred_check
          %p729 = pneg %p344
        $region54: #{tpu_custom_call.1} parent=31 // pred_check_branch
          %731 = sbr.rel (%p729) target = $region56
        $region55: #{tpu_custom_call.1} parent=31 // pred_region
          %v732 = vld [vmem:[#allocation2] sm:$0xff]
          %v733 = vld [vmem:[#allocation2 + $0x8] sm:$0xff]
          %v734 = vmax.f32 %v732, 0.0
          %v735 = vmax.f32 %v733, 0.0
          %v736 = vpack.c.bf16 %v735, %v734
          %737 = vst [vmem:[#allocation3] sm:$0xff] %v736
        $region56: #{tpu_custom_call.1} parent=31 // pred_fallthru
          _
        %p738 = scmp.ge.s32.totalorder %s28, 1
        // Predicated region
        $region57: #{tpu_custom_call.1} parent=31 // pred_check
          %p739 = pneg %p738
        $region58: #{tpu_custom_call.1} parent=31 // pred_check_branch
          %741 = sbr.rel (%p739) target = $region60
        $region59: #{tpu_custom_call.1} parent=31 // pred_region
          %v742 = vld [vmem:[#allocation3] sm:$0xff]
          %v743 = vld [vmem:[%s286] sm:$0xff]
          %v744 = vld [vmem:[%s286 + $0x8] sm:$0xff]
          %v745 = vld [vmem:[%s286 + $0x10] sm:$0xff]
          %v746 = vld [vmem:[%s286 + $0x18] sm:$0xff]
          %v747 = vld [vmem:[%s286 + $0x20] sm:$0xff]
          %v748 = vld [vmem:[%s286 + $0x28] sm:$0xff]
          %v749 = vld [vmem:[%s286 + $0x30] sm:$0xff]
          %v750 = vld [vmem:[%s286 + $0x38] sm:$0xff]
          %v751 = vld [vmem:[%s286 + $0x40] sm:$0xff]
          %v752 = vld [vmem:[%s286 + $0x48] sm:$0xff]
          %v753 = vld [vmem:[%s286 + $0x50] sm:$0xff]
          %v754 = vld [vmem:[%s286 + $0x58] sm:$0xff]
          %v755 = vld [vmem:[%s286 + $0x60] sm:$0xff]
          %v756 = vld [vmem:[%s286 + $0x68] sm:$0xff]
          %v757 = vld [vmem:[%s286 + $0x70] sm:$0xff]
          %v758 = vld [vmem:[%s286 + $0x78] sm:$0xff]
          %v759 = vld [vmem:[%s286 + $0x80] sm:$0xff]
          %v760 = vld [vmem:[%s286 + $0x88] sm:$0xff]
          %v761 = vld [vmem:[%s286 + $0x90] sm:$0xff]
          %v762 = vld [vmem:[%s286 + $0x98] sm:$0xff]
          %v763 = vld [vmem:[%s286 + $0xa0] sm:$0xff]
          %v764 = vld [vmem:[%s286 + $0xa8] sm:$0xff]
          %v765 = vld [vmem:[%s286 + $0xb0] sm:$0xff]
          %v766 = vld [vmem:[%s286 + $0xb8] sm:$0xff]
          %v767 = vld [vmem:[%s286 + $0xc0] sm:$0xff]
          %v768 = vld [vmem:[%s286 + $0xc8] sm:$0xff]
          %v769 = vld [vmem:[%s286 + $0xd0] sm:$0xff]
          %v770 = vld [vmem:[%s286 + $0xd8] sm:$0xff]
          %v771 = vld [vmem:[%s286 + $0xe0] sm:$0xff]
          %v772 = vld [vmem:[%s286 + $0xe8] sm:$0xff]
          %v773 = vld [vmem:[%s286 + $0xf0] sm:$0xff]
          %v774 = vld [vmem:[%s286 + $0xf8] sm:$0xff]
          %v807 = vunpack.c.l.b16 %v743
          %v808 = vunpack.c.h.b16 %v743
          %v809 = vunpack.c.l.b16 %v744
          %v810 = vunpack.c.h.b16 %v744
          %v811 = vunpack.c.l.b16 %v745
          %v812 = vunpack.c.h.b16 %v745
          %v813 = vunpack.c.l.b16 %v746
          %v814 = vunpack.c.h.b16 %v746
          %v815 = vunpack.c.l.b16 %v747
          %v816 = vunpack.c.h.b16 %v747
          %v817 = vunpack.c.l.b16 %v748
          %v818 = vunpack.c.h.b16 %v748
          %v819 = vunpack.c.l.b16 %v749
          %v820 = vunpack.c.h.b16 %v749
          %v821 = vunpack.c.l.b16 %v750
          %v822 = vunpack.c.h.b16 %v750
          %v823 = vunpack.c.l.b16 %v751
          %v824 = vunpack.c.h.b16 %v751
          %v825 = vunpack.c.l.b16 %v752
          %v826 = vunpack.c.h.b16 %v752
          %v827 = vunpack.c.l.b16 %v753
          %v828 = vunpack.c.h.b16 %v753
          %v829 = vunpack.c.l.b16 %v754
          %v830 = vunpack.c.h.b16 %v754
          %v831 = vunpack.c.l.b16 %v755
          %v832 = vunpack.c.h.b16 %v755
          %v833 = vunpack.c.l.b16 %v756
          %v834 = vunpack.c.h.b16 %v756
          %v835 = vunpack.c.l.b16 %v757
          %v836 = vunpack.c.h.b16 %v757
          %v837 = vunpack.c.l.b16 %v758
          %v838 = vunpack.c.h.b16 %v758
          %v839 = vunpack.c.l.b16 %v759
          %v840 = vunpack.c.h.b16 %v759
          %v841 = vunpack.c.l.b16 %v760
          %v842 = vunpack.c.h.b16 %v760
          %v843 = vunpack.c.l.b16 %v761
          %v844 = vunpack.c.h.b16 %v761
          %v845 = vunpack.c.l.b16 %v762
          %v846 = vunpack.c.h.b16 %v762
          %v847 = vunpack.c.l.b16 %v763
          %v848 = vunpack.c.h.b16 %v763
          %v849 = vunpack.c.l.b16 %v764
          %v850 = vunpack.c.h.b16 %v764
          %v851 = vunpack.c.l.b16 %v765
          %v852 = vunpack.c.h.b16 %v765
          %v853 = vunpack.c.l.b16 %v766
          %v854 = vunpack.c.h.b16 %v766
          %v855 = vunpack.c.l.b16 %v767
          %v856 = vunpack.c.h.b16 %v767
          %v857 = vunpack.c.l.b16 %v768
          %v858 = vunpack.c.h.b16 %v768
          %v859 = vunpack.c.l.b16 %v769
          %v860 = vunpack.c.h.b16 %v769
          %v861 = vunpack.c.l.b16 %v770
          %v862 = vunpack.c.h.b16 %v770
          %v863 = vunpack.c.l.b16 %v771
          %v864 = vunpack.c.h.b16 %v771
          %v865 = vunpack.c.l.b16 %v772
          %v866 = vunpack.c.h.b16 %v772
          %v867 = vunpack.c.l.b16 %v773
          %v868 = vunpack.c.h.b16 %v773
          %v869 = vunpack.c.l.b16 %v774
          %v870 = vunpack.c.h.b16 %v774
          %v871 = vpack.c.b16 %v811, %v807
          %v872 = vpack.c.b16 %v812, %v808
          %v873 = vpack.c.b16 %v813, %v809
          %v874 = vpack.c.b16 %v814, %v810
          %v875 = vpack.c.b16 %v819, %v815
          %v876 = vpack.c.b16 %v820, %v816
          %v877 = vpack.c.b16 %v821, %v817
          %v878 = vpack.c.b16 %v822, %v818
          %v879 = vpack.c.b16 %v827, %v823
          %v880 = vpack.c.b16 %v828, %v824
          %v881 = vpack.c.b16 %v829, %v825
          %v882 = vpack.c.b16 %v830, %v826
          %v883 = vpack.c.b16 %v835, %v831
          %v884 = vpack.c.b16 %v836, %v832
          %v885 = vpack.c.b16 %v837, %v833
          %v886 = vpack.c.b16 %v838, %v834
          %v887 = vpack.c.b16 %v843, %v839
          %v888 = vpack.c.b16 %v844, %v840
          %v889 = vpack.c.b16 %v845, %v841
          %v890 = vpack.c.b16 %v846, %v842
          %v891 = vpack.c.b16 %v851, %v847
          %v892 = vpack.c.b16 %v852, %v848
          %v893 = vpack.c.b16 %v853, %v849
          %v894 = vpack.c.b16 %v854, %v850
          %v895 = vpack.c.b16 %v859, %v855
          %v896 = vpack.c.b16 %v860, %v856
          %v897 = vpack.c.b16 %v861, %v857
          %v898 = vpack.c.b16 %v862, %v858
          %v899 = vpack.c.b16 %v867, %v863
          %v900 = vpack.c.b16 %v868, %v864
          %v901 = vpack.c.b16 %v869, %v865
          %v902 = vpack.c.b16 %v870, %v866
          %935 = vmatprep.subr.bf16.mxu0 %v872
          %936 = vmatpush1.bf16.msra.mxu0 %v871
          %937 = vmatprep.subr.bf16.mxu0 %v876
          %938 = vmatpush1.bf16.msra.mxu0 %v875
          %939 = vmatprep.subr.bf16.mxu0 %v880
          %940 = vmatpush1.bf16.msra.mxu0 %v879
          %941 = vmatprep.subr.bf16.mxu0 %v884
          %942 = vmatpush1.bf16.msra.mxu0 %v883
          %943 = vmatprep.subr.bf16.mxu0 %v888
          %944 = vmatpush1.bf16.msra.mxu0 %v887
          %945 = vmatprep.subr.bf16.mxu0 %v892
          %946 = vmatpush1.bf16.msra.mxu0 %v891
          %947 = vmatprep.subr.bf16.mxu0 %v896
          %948 = vmatpush1.bf16.msra.mxu0 %v895
          %949 = vmatprep.subr.bf16.mxu0 %v900
          %950 = vmatpush1.bf16.msra.mxu0 %v899
          %951 = vmatprep.subr.bf16.mxu0 0
          %952 = vmatpush1.bf16.msra.mxu0 0
          %953 = vmatprep.subr.bf16.mxu0 0
          %954 = vmatpush1.bf16.msra.mxu0 0
          %955 = vmatprep.subr.bf16.mxu0 0
          %956 = vmatpush1.bf16.msra.mxu0 0
          %957 = vmatprep.subr.bf16.mxu0 0
          %958 = vmatpush1.bf16.msra.mxu0 0
          %959 = vmatprep.subr.bf16.mxu0 0
          %960 = vmatpush1.bf16.msra.mxu0 0
          %961 = vmatprep.subr.bf16.mxu0 0
          %962 = vmatpush1.bf16.msra.mxu0 0
          %963 = vmatprep.subr.bf16.mxu0 0
          %964 = vmatpush1.bf16.msra.mxu0 0
          %965 = vmatprep.subr.bf16.mxu0 0
          %966 = vmatpush1.bf16.msra.mxu0 0
          %967 = vmatprep.mubr.bf16.mxu0 0
          %968 = vmatmul.mubr.bf16.gmra.mrb[0].mxu0 %v742
          %v969 = vpop.f32.mrb[0].mxu0
          %v970 = vadd.f32 0.0, %v969
          %v971 = vpop.f32.mrb[0].mxu0
          %v972 = vadd.f32 0.0, %v971
          %v973 = vpop.f32.mrb[0].mxu0
          %v974 = vadd.f32 0.0, %v973
          %v975 = vpop.f32.mrb[0].mxu0
          %v976 = vadd.f32 0.0, %v975
          %977 = vdwg.mxu0
          %978 = vmatprep.subr.bf16.mxu0 %v874
          %979 = vmatpush1.bf16.msra.mxu0 %v873
          %980 = vmatprep.subr.bf16.mxu0 %v878
          %981 = vmatpush1.bf16.msra.mxu0 %v877
          %982 = vmatprep.subr.bf16.mxu0 %v882
          %983 = vmatpush1.bf16.msra.mxu0 %v881
          %984 = vmatprep.subr.bf16.mxu0 %v886
          %985 = vmatpush1.bf16.msra.mxu0 %v885
          %986 = vmatprep.subr.bf16.mxu0 %v890
          %987 = vmatpush1.bf16.msra.mxu0 %v889
          %988 = vmatprep.subr.bf16.mxu0 %v894
          %989 = vmatpush1.bf16.msra.mxu0 %v893
          %990 = vmatprep.subr.bf16.mxu0 %v898
          %991 = vmatpush1.bf16.msra.mxu0 %v897
          %992 = vmatprep.subr.bf16.mxu0 %v902
          %993 = vmatpush1.bf16.msra.mxu0 %v901
          %994 = vmatprep.subr.bf16.mxu0 0
          %995 = vmatpush1.bf16.msra.mxu0 0
          %996 = vmatprep.subr.bf16.mxu0 0
          %997 = vmatpush1.bf16.msra.mxu0 0
          %998 = vmatprep.subr.bf16.mxu0 0
          %999 = vmatpush1.bf16.msra.mxu0 0
          %1000 = vmatprep.subr.bf16.mxu0 0
          %1001 = vmatpush1.bf16.msra.mxu0 0
          %1002 = vmatprep.subr.bf16.mxu0 0
          %1003 = vmatpush1.bf16.msra.mxu0 0
          %1004 = vmatprep.subr.bf16.mxu0 0
          %1005 = vmatpush1.bf16.msra.mxu0 0
          %1006 = vmatprep.subr.bf16.mxu0 0
          %1007 = vmatpush1.bf16.msra.mxu0 0
          %1008 = vmatprep.subr.bf16.mxu0 0
          %1009 = vmatpush1.bf16.msra.mxu0 0
          %1010 = vmatprep.mubr.bf16.mxu0 0
          %1011 = vmatmul.mubr.bf16.gmra.mrb[0].mxu0 %v742
          %v1012 = vpop.f32.mrb[0].mxu0
          %v1013 = vadd.f32 0.0, %v1012
          %v1014 = vpop.f32.mrb[0].mxu0
          %v1015 = vadd.f32 0.0, %v1014
          %v1016 = vpop.f32.mrb[0].mxu0
          %v1017 = vadd.f32 0.0, %v1016
          %v1018 = vpop.f32.mrb[0].mxu0
          %v1019 = vadd.f32 0.0, %v1018
          %1020 = vdwg.mxu0
          %v1021 = vmax.f32 %v970, 0.0
          %v1022 = vmax.f32 %v972, 0.0
          %v1023 = vmax.f32 %v1013, 0.0
          %v1024 = vmax.f32 %v1015, 0.0
          %v1025 = vmax.f32 %v974, 0.0
          %v1026 = vmax.f32 %v976, 0.0
          %v1027 = vmax.f32 %v1017, 0.0
          %v1028 = vmax.f32 %v1019, 0.0
          %1029 = vst [vmem:[%s318] sm:$0xff] %v1021
          %1030 = vst [vmem:[%s318 + $0x8] sm:$0xff] %v1022
          %1031 = vst [vmem:[%s318 + $0x10] sm:$0xff] %v1023
          %1032 = vst [vmem:[%s318 + $0x18] sm:$0xff] %v1024
          %1033 = vst [vmem:[%s318 + $0x20] sm:$0xff] %v1025
          %1034 = vst [vmem:[%s318 + $0x28] sm:$0xff] %v1026
          %1035 = vst [vmem:[%s318 + $0x30] sm:$0xff] %v1027
          %1036 = vst [vmem:[%s318 + $0x38] sm:$0xff] %v1028
        $region60: #{tpu_custom_call.1} parent=31 // pred_fallthru
          _
        %s1037 = sand.u32 %s145, 1
        %s1038 = scalar_lea.sflag [#allocation6], %s1037
        %s1039 = sand.u32 %s145, 1
        %s1040 = smul.addr %s1039, 64
        %s1041 = scalar_lea.vmem [#allocation10], %s1040
        // Predicated region
        $region61: #{tpu_custom_call.1} parent=31 // pred_check
          %p1042 = pneg %p155
        $region62: #{tpu_custom_call.1} parent=31 // pred_check_branch
          %1044 = sbr.rel (%p1042) target = $region64
        $region63: #{tpu_custom_call.1} parent=31 // pred_region
          %s1045 = ssub.s32 %s28, 1
          %p1046 = scmp.gt.s32.totalorder %s1045, 0
          %s1047 = scalar_select %p1046, %s1045, 0
          %s1048 = smul.u32 2, %s27
          %s1049 = smul.u32 4, %s1047
          %s1050 = ssub.s32 1, %s1048
          %s1051 = smul.u32 128, %s1050
          %s1052 = ssub.s32 2, %s1049
          %s1053 = smul.u32 %s1051, %s1052
          %s1055 = ssub.s32 1024, %s1053
          %1056 = vsyncadd %s1038, %s1055
          %p1057 = scmp.ne.s32.totalorder 0, %s1053
          %s1058 = smul.addr %s1048, 2
          %s1059 = sadd.s32 %s1049, %s1058
          %s1060 = smul.addr %s1059, 128
          %s1061 = scalar_lea.hbm %s3, %s1060
          %s1062 = smul.u32 %s1052, 8
          %s1063 = smul.u32 %s1062, %s1050
          %s1064 = sshll.u32 %s1041, 4
          %s1065 = int_to_ptr.vmem [resolvable:$true] %s1064
          %s1066 = sshll.u32 %s1063, 4
          %1070 = dma.vmem_to_hbm [thread:$0]  (%p1057), %s1065, %s1066, %s1061, %s1038, 512, 256, %s1062
        $region64: #{tpu_custom_call.1} parent=31 // pred_fallthru
          _
      $region32: #{tpu_custom_call.1} parent=5 // pred_fallthru
        _
      %p1071 = scmp.le.s32.totalorder 2, %s18
      // Predicated region
      $region65: #{tpu_custom_call.1} parent=5 // pred_check
        %p1072 = pneg %p1071
      $region66: #{tpu_custom_call.1} parent=5 // pred_check_branch
        %1074 = sbr.rel (%p1072) target = $region68
      $region67: #{tpu_custom_call.1} parent=5 // pred_region
        %s1075 = ssub.s32 %s18, 2
        // Predicated region
        $region69: #{tpu_custom_call.1} parent=67 // pred_check
          %p1076 = pneg %p161
        $region70: #{tpu_custom_call.1} parent=67 // pred_check_branch
          %1078 = sbr.rel (%p1076) target = $region72
        $region71: #{tpu_custom_call.1} parent=67 // pred_region
          %s1079 = sand.u32 %s146, 1
          %s1080 = scalar_lea.sflag [#allocation6], %s1079
          %s1081 = sand.u32 %s146, 1
          %s1082 = smul.addr %s1081, 64
          %s1083 = scalar_lea.vmem [#allocation10], %s1082
          %1084 = dma.done %s1080, 1024
        $region72: #{tpu_custom_call.1} parent=67 // pred_fallthru
          _
      $region68: #{tpu_custom_call.1} parent=5 // pred_fallthru
        _
    $region6: #{tpu_custom_call.1} parent=1 // loop_footer
      %s22 = sadd.s32 1, %s18
    $region7: #{tpu_custom_call.1} parent=1 // loop_footer_branch
      %17 = sbr.rel target = $region3
    $region8: #{tpu_custom_call.1} parent=1 // loop_exit
      _
    %1085 = vsyncpa [#allocation5], 1
    %s1086 = scalar_lea.sflag [#allocation5], 1
    %1087 = vsyncpa %s1086, 1
    %1088 = vsyncpa [#allocation8], 1
    %s1089 = scalar_lea.sflag [#allocation8], 1
    %1090 = vsyncpa %s1089, 1
    %1091 = vsyncpa [#allocation6], 1
    %s1092 = scalar_lea.sflag [#allocation6], 1
    %1093 = vsyncpa %s1092, 1

</llo_original>
